<compile_context>
chip_gen: v7x
topology: tpu7x:2x2x1
jax: 0.10.0
libtpu: 0.0.40
codegen_flags: <defaults>
</compile_context>

<pallas_src>
import math
import typing as tp

import jax
import jax.numpy as jnp
from jax.experimental import pallas as pl
from jax.experimental.pallas import tpu as pltpu


class _VQForwardResult(tp.NamedTuple):
    quantized: jax.Array
    codes: jax.Array
    loss: jax.Array
    metrics: tp.Dict[str, jax.Array]


def _round_up(x: int, m: int) -> int:
    return ((x + m - 1) // m) * m


def _cdiv(a: int, b: int) -> int:
    return (a + b - 1) // b


_PAD_DIST = 1e30  # squared-norm value for padded codebook rows (never win argmin)


# ----------------------------------------------------------------------------
# Pallas kernel: one (D, TT) slab of frames against the resident codebook.
#   x_ref    (1, D, TT) f32   — activations, T on lanes
#   cb_ref   (Kp, D)    f32   — padded codebook
#   cbt_ref  (D, Kp)    f32   — padded codebook, transposed (for the gather)
#   cbsq_ref (Kp, 1)    f32   — ||e_k||^2 (padded rows = 1e30)
# outputs:
#   q_ref     (1, D, TT) f32  — quantized frames
#   codes_ref (1, 1, TT) i32  — nearest-codebook index per frame (lane-dense)
#   sse_ref   (1, 1, TT) f32  — per-frame sum_D (x - q)^2 (for the VQ loss)
# ----------------------------------------------------------------------------
def _vq_kernel(x_ref, cb_ref, cbt_ref, cbsq_ref, q_ref, codes_ref, sse_ref):
    x = x_ref[0]                                                   # (D, TT)
    cb = cb_ref[...]                                               # (Kp, D)
    cbt = cbt_ref[...]                                             # (D, Kp)
    cbsq = cbsq_ref[...]                                           # (Kp, 1)

    # ||x||^2 dropped: argmin over k is invariant to the per-frame term.
    dots = jnp.dot(cb, x, preferred_element_type=jnp.float32)      # (Kp, TT)
    dist = cbsq - 2.0 * dots                                       # (Kp, TT)

    kp = dist.shape[0]
    iota_k = jax.lax.broadcasted_iota(jnp.int32, dist.shape, 0)    # (Kp, TT)
    min_d = jnp.min(dist, axis=0, keepdims=True)                   # (1, TT)
    # First-match index on ties (matches argmin semantics; avoids multi-hot).
    codes = jnp.min(jnp.where(dist == min_d, iota_k, kp),
                    axis=0, keepdims=True).astype(jnp.int32)       # (1, TT)

    # Codebook gather as a one-hot matmul on the MXU.
    onehot = (iota_k == codes).astype(jnp.float32)                 # (Kp, TT)
    q = jnp.dot(cbt, onehot, preferred_element_type=jnp.float32)   # (D, TT)

    q_ref[0] = q.astype(q_ref.dtype)
    codes_ref[0] = codes

    diff = x - q
    sse_ref[0] = jnp.sum(diff * diff, axis=0, keepdims=True)       # (1, TT)


def _vq_pallas(x: jax.Array, codebook: jax.Array, *, tile_t: int = 2048):
    """Nearest-codebook VQ on (B, D, T) activations with a (K, D) codebook.

    Returns:
      q        (B, D, T) f32 — quantized activations (gathered codebook rows)
      codes    (B, T)    i32 — nearest-codebook index per frame
      sse_cols (B, T)    f32 — per-frame sum over D of (x - q)^2
    """
    x = x.astype(jnp.float32)
    b, d, t = x.shape
    k = codebook.shape[0]

    # Pad K so the (Kp, TT) distance / one-hot tiles are full-lane/sublane.
    kpad = _round_up(max(k, 128), 128)

    # Cap the time tile so the (Kp, TT) f32 intermediates stay well under VMEM
    # (conservative: safe on v7x's 64 MiB chips too).
    max_tt = max(128, ((4 * 1024 * 1024) // (kpad * 4)) // 128 * 128)
    tile_t = max(128, min(tile_t, max_tt))

    t128 = _round_up(t, 128)
    n_t = _cdiv(t128, tile_t)
    tt = _round_up(_cdiv(t128, n_t), 128)     # lane tile, multiple of 128
    tpad = n_t * tt

    if tpad != t:
        x = jnp.pad(x, ((0, 0), (0, 0), (0, tpad - t)))

    cb = codebook.astype(jnp.float32)
    cb_sq = jnp.sum(cb * cb, axis=-1, keepdims=True)               # (K, 1)
    if kpad != k:
        cb = jnp.pad(cb, ((0, kpad - k), (0, 0)))
        cb_sq = jnp.pad(cb_sq, ((0, kpad - k), (0, 0)),
                        constant_values=_PAD_DIST)
    cb_t = cb.T                                                    # (D, Kp)

    q, codes, sse = pl.pallas_call(
        _vq_kernel,
        out_shape=(
            jax.ShapeDtypeStruct((b, d, tpad), jnp.float32),
            jax.ShapeDtypeStruct((b, 1, tpad), jnp.int32),
            jax.ShapeDtypeStruct((b, 1, tpad), jnp.float32),
        ),
        grid_spec=pltpu.PrefetchScalarGridSpec(
            num_scalar_prefetch=0,
            grid=(b, n_t),
            in_specs=[
                pl.BlockSpec((1, d, tt), lambda bi, ti: (bi, 0, ti)),
                pl.BlockSpec((kpad, d), lambda bi, ti: (0, 0)),   # resident
                pl.BlockSpec((d, kpad), lambda bi, ti: (0, 0)),   # resident
                pl.BlockSpec((kpad, 1), lambda bi, ti: (0, 0)),   # resident
            ],
            out_specs=[
                pl.BlockSpec((1, d, tt), lambda bi, ti: (bi, 0, ti)),
                pl.BlockSpec((1, 1, tt), lambda bi, ti: (bi, 0, ti)),
                pl.BlockSpec((1, 1, tt), lambda bi, ti: (bi, 0, ti)),
            ],
        ),
        compiler_params=pltpu.CompilerParams(
            dimension_semantics=("parallel", "parallel"),
            vmem_limit_bytes=32 * 1024 * 1024,
        ),
    )(x, cb, cb_t, cb_sq)

    return q[:, :, :t], codes[:, 0, :t], sse[:, 0, :t]


class VectorQuantizationPallas:
    """JAX/Pallas mirror of the PyTorch VectorQuantization module (forward)."""

    def __init__(self, dim: int, codebook_size: int,
                 codebook_dim: tp.Optional[int] = None, decay: float = 0.99,
                 epsilon: float = 1e-5, threshold_usage_ratio: float = 0.1,
                 *, rng: tp.Optional[jax.Array] = None):
        self.dim = dim
        self.codebook_size = codebook_size
        self.codebook_dim = dim if codebook_dim is None else codebook_dim
        self.decay = decay
        self.epsilon = epsilon
        self.threshold_usage_ratio = threshold_usage_ratio
        self.requires_projection = self.codebook_dim != dim

        rng = jax.random.PRNGKey(42) if rng is None else rng
        k_emb, k_in, k_out = jax.random.split(rng, 3)

        # EuclideanCodebook buffers (demo: behave as an already-initialized
        # codebook: cluster_usage = 1 -> embedding == embedding_sum).
        self.cluster_usage = jnp.ones((codebook_size,), jnp.float32)
        self.embedding_sum = jax.random.normal(
            k_emb, (codebook_size, self.codebook_dim), jnp.float32)

        if self.requires_projection:
            s_in = 1.0 / math.sqrt(dim)
            self.w_in = jax.random.uniform(
                k_in, (self.codebook_dim, dim), jnp.float32, -s_in, s_in)
            self.b_in = jnp.zeros((self.codebook_dim,), jnp.float32)
            s_out = 1.0 / math.sqrt(self.codebook_dim)
            self.w_out = jax.random.uniform(
                k_out, (dim, self.codebook_dim), jnp.float32, -s_out, s_out)
            self.b_out = jnp.zeros((dim,), jnp.float32)

    # ---- codebook properties -------------------------------------------
    @property
    def embedding(self) -> jax.Array:
        usage = jnp.maximum(self.cluster_usage, self.epsilon)
        return self.embedding_sum / usage[:, None]

    @property
    def initialized(self) -> bool:
        return True

    # ---- projections (plain-JAX glue, operate directly on (B, D, T)) ----
    def _project_in(self, x: jax.Array) -> jax.Array:
        if not self.requires_projection:
            return x
        return jnp.einsum('cd,bdt->bct', self.w_in, x) + self.b_in[None, :, None]

    def _project_out(self, q: jax.Array) -> jax.Array:
        if not self.requires_projection:
            return q
        return jnp.einsum('dc,bct->bdt', self.w_out, q) + self.b_out[None, :, None]

    # ---- forward / encode / decode ---------------------------------------
    def forward(self, x: jax.Array, initialize: bool = True,
                training: bool = False) -> _VQForwardResult:
        # x: (B, D, T)
        x = x.astype(jnp.float32)
        x_cb = self._project_in(x)                                  # (B, Dc, T)
        q_cb, codes, sse = _vq_pallas(x_cb, self.embedding)

        if training:
            # Straight-through value equals q_cb; commitment loss is the fused
            # in-kernel per-frame SSE, finished here (no extra HBM pass).
            b, dc, t = x_cb.shape
            loss = jnp.sum(sse) / jnp.float32(b * dc * t)
            # TODO(synk): EMA updates of cluster_usage / embedding_sum, k-means
            # init, expired-code replacement and distributed broadcasts are
            # stateful training-time bookkeeping not implemented here.
        else:
            loss = jnp.zeros((), jnp.float32)

        quantized = self._project_out(q_cb)                         # (B, D, T)
        return _VQForwardResult(quantized=quantized, codes=codes,
                                loss=loss, metrics={})

    __call__ = forward

    def encode(self, x: jax.Array) -> jax.Array:
        x_cb = self._project_in(x.astype(jnp.float32))
        _, codes, _ = _vq_pallas(x_cb, self.embedding)
        return codes                                                # (B, T)

    def decode(self, codes: jax.Array) -> jax.Array:
        # Plain-JAX gather (not a hot path).
        b, t = codes.shape
        emb = self.embedding
        q = jnp.take(emb, codes.reshape(-1), axis=0).reshape(b, t, self.codebook_dim)
        q = jnp.transpose(q, (0, 2, 1))                             # (B, Dc, T)
        return self._project_out(q)                                 # (B, D, T)


if __name__ == "__main__":
    # Small shapes consistent with the module: batch=2, hidden=32, seq=8.
    B, D, T = 2, 32, 8
    K = 64
    key = jax.random.PRNGKey(0)
    kx, kparams = jax.random.split(key)
    x = jax.random.normal(kx, (B, D, T), dtype=jnp.float32)

    vq = VectorQuantizationPallas(dim=D, codebook_size=K, rng=kparams)

    res = vq(x)                       # eval-mode forward
    jax.block_until_ready(res.quantized)
    jax.block_until_ready(res.codes)
    jax.block_until_ready(res.loss)

    # ---- pure-JAX reference of the forward path --------------------------
    emb = vq.embedding                                    # (K, D)
    xf = jnp.transpose(x, (0, 2, 1)).reshape(-1, D)       # (B*T, D)
    d_ref = (jnp.sum(xf * xf, -1, keepdims=True)
             - 2.0 * xf @ emb.T
             + jnp.sum(emb * emb, -1)[None, :])
    codes_ref = jnp.argmin(d_ref, axis=-1).astype(jnp.int32).reshape(B, T)
    q_ref = jnp.take(emb, codes_ref.reshape(-1), axis=0).reshape(B, T, D)
    q_ref = jnp.transpose(q_ref, (0, 2, 1))               # (B, D, T)

    assert res.quantized.shape == (B, D, T)
    assert res.codes.shape == (B, T)
    assert jnp.array_equal(res.codes, codes_ref)
    assert jnp.allclose(res.quantized, q_ref, atol=1e-5)
    assert float(res.loss) == 0.0                         # eval: loss is zero

    # Training-mode forward exercises the fused commitment-loss output.
    res_tr = vq(x, training=True)
    jax.block_until_ready(res_tr.loss)
    loss_ref = jnp.mean((x - q_ref) ** 2)
    assert jnp.allclose(res_tr.loss, loss_ref, rtol=1e-5, atol=1e-6)

    # encode / decode round trip.
    codes_e = vq.encode(x)
    jax.block_until_ready(codes_e)
    assert jnp.array_equal(codes_e, codes_ref)
    dec = vq.decode(codes_e)
    jax.block_until_ready(dec)
    assert jnp.allclose(dec, q_ref, atol=1e-5)

    print("KERNEL_OK")
</pallas_src>

<mosaic_0001>
module attributes {stable_mosaic.version = 11 : i64} {
  func.func @_vq_kernel(%arg0: i32, %arg1: i32, %arg2: memref<1x32x128xf32, #tpu.memory_space<vmem>>, %arg3: memref<128x32xf32, #tpu.memory_space<vmem>>, %arg4: memref<32x128xf32, #tpu.memory_space<vmem>>, %arg5: memref<128x1xf32, #tpu.memory_space<vmem>>, %arg6: memref<1x32x128xf32, #tpu.memory_space<vmem>>, %arg7: memref<1x1x128xi32, #tpu.memory_space<vmem>>, %arg8: memref<1x1x128xf32, #tpu.memory_space<vmem>>) attributes {dimension_semantics = [#tpu.dimension_semantics<parallel>, #tpu.dimension_semantics<parallel>], iteration_bounds = array<i64: 2, 1>, scalar_prefetch = 0 : i64, scratch_operands = 0 : i64, tpu.core_type = #tpu.core_type<tc>, window_params = [{transform_indices = @transform_0, window_bounds = array<i64: 1, 32, 128>}, {pipeline_mode = #tpu.pipeline_mode<synchronous>, transform_indices = @transform_1, window_bounds = array<i64: 128, 32>}, {pipeline_mode = #tpu.pipeline_mode<synchronous>, transform_indices = @transform_2, window_bounds = array<i64: 32, 128>}, {pipeline_mode = #tpu.pipeline_mode<synchronous>, transform_indices = @transform_3, window_bounds = array<i64: 128, 1>}, {transform_indices = @transform_4, window_bounds = array<i64: 1, 32, 128>}, {transform_indices = @transform_5, window_bounds = array<i64: 1, 1, 128>}, {transform_indices = @transform_6, window_bounds = array<i64: 1, 1, 128>}]} {
    %c0 = arith.constant 0 : index
    %c0_0 = arith.constant 0 : index
    %c0_1 = arith.constant 0 : index
    %0 = vector.load %arg2[%c0, %c0_0, %c0_1] : memref<1x32x128xf32, #tpu.memory_space<vmem>>, vector<1x32x128xf32>
    %1 = vector.shape_cast %0 : vector<1x32x128xf32> to vector<32x128xf32>
    %c0_2 = arith.constant 0 : index
    %c0_3 = arith.constant 0 : index
    %2 = vector.load %arg3[%c0_2, %c0_3] : memref<128x32xf32, #tpu.memory_space<vmem>>, vector<128x32xf32>
    %c0_4 = arith.constant 0 : index
    %c0_5 = arith.constant 0 : index
    %3 = vector.load %arg4[%c0_4, %c0_5] : memref<32x128xf32, #tpu.memory_space<vmem>>, vector<32x128xf32>
    %c0_6 = arith.constant 0 : index
    %c0_7 = arith.constant 0 : index
    %4 = vector.load %arg5[%c0_6, %c0_7] : memref<128x1xf32, #tpu.memory_space<vmem>>, vector<128x1xf32>
    %cst = arith.constant dense<0.000000e+00> : vector<128x128xf32>
    %5 = tpu.matmul %2, %1, %cst {dimension_numbers = #tpu.dot_dimension_numbers<[1], [0], [0], [1], [0, 0, 1, 1], [], []>} : vector<128x32xf32>, vector<32x128xf32>, vector<128x128xf32> -> vector<128x128xf32>
    %cst_8 = arith.constant 2.000000e+00 : f32
    %6 = vector.broadcast %cst_8 : f32 to vector<128x128xf32>
    %7 = arith.mulf %6, %5 : vector<128x128xf32>
    %8 = vector.broadcast %4 : vector<128x1xf32> to vector<128x128xf32>
    %9 = arith.subf %8, %7 : vector<128x128xf32>
    %10 = tpu.iota {dimensions = array<i32: 0>} : vector<128x128xi32>
    %cst_9 = arith.constant dense<0x7F800000> : vector<128xf32>
    %11 = vector.multi_reduction <minimumf>, %9, %cst_9 [0] : vector<128x128xf32> to vector<128xf32>
    %12 = vector.shape_cast %11 : vector<128xf32> to vector<1x128xf32>
    %13 = vector.broadcast %12 : vector<1x128xf32> to vector<128x128xf32>
    %14 = arith.cmpf oeq, %9, %13 : vector<128x128xf32>
    %c128_i32 = arith.constant 128 : i32
    %15 = vector.broadcast %c128_i32 : i32 to vector<128x128xi32>
    %16 = arith.select %14, %10, %15 : vector<128x128xi1>, vector<128x128xi32>
    %cst_10 = arith.constant dense<2147483647> : vector<128xi32>
    %17 = vector.multi_reduction <minsi>, %16, %cst_10 [0] : vector<128x128xi32> to vector<128xi32>
    %18 = vector.shape_cast %17 : vector<128xi32> to vector<1x128xi32>
    %19 = vector.broadcast %18 : vector<1x128xi32> to vector<128x128xi32>
    %20 = arith.cmpi eq, %10, %19 : vector<128x128xi32>
    %21 = arith.extui %20 : vector<128x128xi1> to vector<128x128xi32>
    %22 = arith.sitofp %21 : vector<128x128xi32> to vector<128x128xf32>
    %cst_11 = arith.constant dense<0.000000e+00> : vector<32x128xf32>
    %23 = tpu.matmul %3, %22, %cst_11 {dimension_numbers = #tpu.dot_dimension_numbers<[1], [0], [0], [1], [0, 0, 1, 1], [], []>} : vector<32x128xf32>, vector<128x128xf32>, vector<32x128xf32> -> vector<32x128xf32>
    %c0_12 = arith.constant 0 : index
    %c0_13 = arith.constant 0 : index
    %c0_14 = arith.constant 0 : index
    %24 = vector.load %arg6[%c0_12, %c0_13, %c0_14] : memref<1x32x128xf32, #tpu.memory_space<vmem>>, vector<1x32x128xf32>
    %25 = vector.shape_cast %24 : vector<1x32x128xf32> to vector<32x128xf32>
    %26 = vector.shape_cast %23 : vector<32x128xf32> to vector<1x32x128xf32>
    tpu.vector_store %arg6[%c0_12, %c0_13, %c0_14], %26 {strides = array<i32>} : memref<1x32x128xf32, #tpu.memory_space<vmem>>, vector<1x32x128xf32>,
    %c0_15 = arith.constant 0 : index
    %c0_16 = arith.constant 0 : index
    %c0_17 = arith.constant 0 : index
    %27 = vector.load %arg7[%c0_15, %c0_16, %c0_17] : memref<1x1x128xi32, #tpu.memory_space<vmem>>, vector<1x1x128xi32>
    %28 = vector.shape_cast %27 : vector<1x1x128xi32> to vector<1x128xi32>
    %29 = vector.shape_cast %18 : vector<1x128xi32> to vector<1x1x128xi32>
    tpu.vector_store %arg7[%c0_15, %c0_16, %c0_17], %29 {strides = array<i32>} : memref<1x1x128xi32, #tpu.memory_space<vmem>>, vector<1x1x128xi32>,
    %30 = arith.subf %1, %23 : vector<32x128xf32>
    %31 = arith.mulf %30, %30 : vector<32x128xf32>
    %cst_18 = arith.constant dense<0.000000e+00> : vector<128xf32>
    %32 = vector.multi_reduction <add>, %31, %cst_18 [0] : vector<32x128xf32> to vector<128xf32>
    %33 = vector.shape_cast %32 : vector<128xf32> to vector<1x128xf32>
    %c0_19 = arith.constant 0 : index
    %c0_20 = arith.constant 0 : index
    %c0_21 = arith.constant 0 : index
    %34 = vector.load %arg8[%c0_19, %c0_20, %c0_21] : memref<1x1x128xf32, #tpu.memory_space<vmem>>, vector<1x1x128xf32>
    %35 = vector.shape_cast %34 : vector<1x1x128xf32> to vector<1x128xf32>
    %36 = vector.shape_cast %33 : vector<1x128xf32> to vector<1x1x128xf32>
    tpu.vector_store %arg8[%c0_19, %c0_20, %c0_21], %36 {strides = array<i32>} : memref<1x1x128xf32, #tpu.memory_space<vmem>>, vector<1x1x128xf32>,
    return
  }
  func.func @transform_0(%arg0: i32, %arg1: i32) -> (i32, i32, i32) {
    %c0_i32 = arith.constant 0 : i32
    %c0_i32_0 = arith.constant 0 : i32
    return %arg0, %c0_i32, %arg1 : i32, i32, i32
  }
  func.func @transform_1(%arg0: i32, %arg1: i32) -> (i32, i32) {
    %c0_i32 = arith.constant 0 : i32
    %c0_i32_0 = arith.constant 0 : i32
    %c0_i32_1 = arith.constant 0 : i32
    return %c0_i32, %c0_i32_0 : i32, i32
  }
  func.func @transform_2(%arg0: i32, %arg1: i32) -> (i32, i32) {
    %c0_i32 = arith.constant 0 : i32
    %c0_i32_0 = arith.constant 0 : i32
    %c0_i32_1 = arith.constant 0 : i32
    return %c0_i32, %c0_i32_0 : i32, i32
  }
  func.func @transform_3(%arg0: i32, %arg1: i32) -> (i32, i32) {
    %c0_i32 = arith.constant 0 : i32
    %c0_i32_0 = arith.constant 0 : i32
    %c0_i32_1 = arith.constant 0 : i32
    return %c0_i32, %c0_i32_0 : i32, i32
  }
  func.func @transform_4(%arg0: i32, %arg1: i32) -> (i32, i32, i32) {
    %c0_i32 = arith.constant 0 : i32
    %c0_i32_0 = arith.constant 0 : i32
    return %arg0, %c0_i32, %arg1 : i32, i32, i32
  }
  func.func @transform_5(%arg0: i32, %arg1: i32) -> (i32, i32, i32) {
    %c0_i32 = arith.constant 0 : i32
    %c0_i32_0 = arith.constant 0 : i32
    return %arg0, %c0_i32, %arg1 : i32, i32, i32
  }
  func.func @transform_6(%arg0: i32, %arg1: i32) -> (i32, i32, i32) {
    %c0_i32 = arith.constant 0 : i32
    %c0_i32_0 = arith.constant 0 : i32
    return %arg0, %c0_i32, %arg1 : i32, i32, i32
  }
}

</mosaic_0001>

<llo_original>
// kernel: tpu_custom_call.1
$region0: #{tpu_custom_call.1}
  #allocation0 [shape = 'u32[]', space=smem, size = 0x4, offset = 0x4, fixed_abs, tag = 'smem constant byte address 0x4 - core index']
  #allocation1 [shape = 'u32[144,128]{1,0:T(1,128)}', space=vmem, size = 0x12000, scoped, tag = 'internal scratch']
  %s0 = inlined_call_operand.vmem [shape: f32[2,32,128], index: 0, kind: input, shape index: {}]
  %s1 = inlined_call_operand.vmem [shape: f32[128,32], index: 1, kind: input, shape index: {}]
  %s2 = inlined_call_operand.vmem [shape: f32[32,128], index: 2, kind: input, shape index: {}]
  %s3 = inlined_call_operand.vmem [shape: f32[128,1], index: 3, kind: input, shape index: {}]
  %s4 = inlined_call_operand.hbm [shape: f32[2,32,128], index: 4, kind: output, shape index: {0}]
  %s5 = inlined_call_operand.hbm [shape: s32[2,1,128], index: 5, kind: output, shape index: {1}]
  %s6 = inlined_call_operand.hbm [shape: f32[2,1,128], index: 6, kind: output, shape index: {2}]
  %7 = xla_tuple %s4, %s5, %s6
  %s8 = sld [smem:[#allocation0]]
  $region65: #{tpu_custom_call.1} parent=0
    _
  %s10 = ssub.s32 1, %s8
  %s11 = scalar_select 0, %s10, %s8
  $region1: #{tpu_custom_call.1} parent=0
    #allocation2 [shape = 'u8[32768]{0}', space=vmem, size = 0x8000, scoped, tag = 'output window, operand 0']
    #allocation3 [shape = 's32[2]{0}', space=sflag, size = 0x8, scoped, tag = 'scoped memory for tpu_custom_call.1']
    #allocation4 [shape = 'u8[1024]{0}', space=vmem, size = 0x400, scoped, tag = 'output window, operand 1']
    #allocation5 [shape = 's32[2]{0}', space=sflag, size = 0x8, scoped, tag = 'scoped memory for tpu_custom_call.1']
    #allocation6 [shape = 'u8[1024]{0}', space=vmem, size = 0x400, scoped, tag = 'output window, operand 2']
    %12 = vsyncpa [#allocation3], 0
    %s13 = scalar_lea.sflag [#allocation3], 1
    %14 = vsyncpa %s13, 0
    %15 = vsyncpa [#allocation5], 0
    %s16 = scalar_lea.sflag [#allocation5], 1
    %17 = vsyncpa %s16, 0
    loop: start=0, step=1, limit=4
    $region2: #{tpu_custom_call.1} parent=1 // loop_pre_header
      _
    $region3: #{tpu_custom_call.1} parent=1 // loop_header
      %s19 = sphi 0, %s23
      %p20 = scmp.ge.s32.totalorder %s19, 4
      %s26 = sphi 0, %s38
      %s27 = sphi 0, %s34
      %s28 = sphi 0, %s26
      %s29 = sphi 0, %s27
      %s30 = sphi 0, %s28
      %s31 = sphi 0, %s29
      %s43 = sphi 0, %s45
      %s46 = sphi 0, %s43
      %s47 = sphi 0, %s46
      %s63 = sphi 0, %s47
      %s67 = sphi 0, %s67
      %s69 = sphi 0, %s67
      %s70 = sphi 0, %s69
      %s84 = sphi 0, %s70
      %s88 = sphi 0, %s88
      %s90 = sphi 0, %s88
      %s91 = sphi 0, %s90
      %s105 = sphi 0, %s91
      %s109 = sphi 0, %s109
      %s111 = sphi 0, %s109
      %s112 = sphi 0, %s111
      %s126 = sphi 0, %s112
      %s134 = sphi 0, %s136
      %s137 = sphi 0, %s134
      %s138 = sphi 0, %s137
      %s154 = sphi 0, %s138
      %s162 = sphi 0, %s164
      %s165 = sphi 0, %s162
      %s166 = sphi 0, %s165
      %s182 = sphi 0, %s166
      %s190 = sphi 0, %s192
      %s193 = sphi 0, %s190
      %s194 = sphi 0, %s193
      %s210 = sphi 0, %s194
    $region4: #{tpu_custom_call.1} parent=1 // loop_header_branch
      %22 = sbr.rel (%p20) target = $region8
    $region5: #{tpu_custom_call.1} parent=1 // loop_body
      %s24 = ssub.s32 %s19, 1
      %s25 = ssub.s32 %s19, 2
      %s32 = sadd.s32 1, %s27
      %p33 = scmp.ge.s32.totalorder %s32, 1
      %s34 = scalar_select %p33, 0, %s32
      %s35 = sadd.s32 1, %s26
      %s36 = scalar_select %p33, %s35, %s26
      %p37 = scmp.ge.s32.totalorder %s36, 2
      %s38 = scalar_select %p37, 0, %s36
      %s39 = ssub.s32 %s26, %s38
      %s40 = ssub.s32 %s27, %s34
      %s41 = sor.u32 %s39, %s40
      %p42 = scmp.eq.s32.totalorder %s41, 0
      %s44 = sadd.s32 %s43, 1
      %s45 = scalar_select %p42, %s43, %s44
      %p48 = pneg %p42
      %p49 = scmp.eq.s32.totalorder %s19, 1
      %p50 = por %p48, %p49
      %p51 = scmp.ne.s32.totalorder %s43, %s46
      %p52 = scmp.eq.s32.totalorder %s19, 0
      %p53 = por %p51, %p52
      %p54 = scmp.ne.s32.totalorder %s43, %s46
      %p55 = scmp.eq.s32.totalorder %s24, 1
      %p56 = por %p54, %p55
      %p57 = scmp.ne.s32.totalorder %s46, %s47
      %p58 = scmp.eq.s32.totalorder %s24, 0
      %p59 = por %p57, %p58
      %p60 = scmp.ne.s32.totalorder %s46, %s47
      %p61 = scmp.eq.s32.totalorder %s25, 1
      %p62 = por %p60, %p61
      %p64 = scmp.ne.s32.totalorder %s47, %s63
      %p65 = scmp.eq.s32.totalorder %s25, 0
      %p66 = por %p64, %p65
      %s68 = sadd.s32 %s67, 1
      %p71 = scmp.eq.s32.totalorder %s19, 1
      %p72 = scmp.ne.s32.totalorder %s67, %s69
      %p73 = scmp.eq.s32.totalorder %s19, 0
      %p74 = por %p72, %p73
      %p75 = scmp.ne.s32.totalorder %s67, %s69
      %p76 = scmp.eq.s32.totalorder %s24, 1
      %p77 = por %p75, %p76
      %p78 = scmp.ne.s32.totalorder %s69, %s70
      %p79 = scmp.eq.s32.totalorder %s24, 0
      %p80 = por %p78, %p79
      %p81 = scmp.ne.s32.totalorder %s69, %s70
      %p82 = scmp.eq.s32.totalorder %s25, 1
      %p83 = por %p81, %p82
      %p85 = scmp.ne.s32.totalorder %s70, %s84
      %p86 = scmp.eq.s32.totalorder %s25, 0
      %p87 = por %p85, %p86
      %s89 = sadd.s32 %s88, 1
      %p92 = scmp.eq.s32.totalorder %s19, 1
      %p93 = scmp.ne.s32.totalorder %s88, %s90
      %p94 = scmp.eq.s32.totalorder %s19, 0
      %p95 = por %p93, %p94
      %p96 = scmp.ne.s32.totalorder %s88, %s90
      %p97 = scmp.eq.s32.totalorder %s24, 1
      %p98 = por %p96, %p97
      %p99 = scmp.ne.s32.totalorder %s90, %s91
      %p100 = scmp.eq.s32.totalorder %s24, 0
      %p101 = por %p99, %p100
      %p102 = scmp.ne.s32.totalorder %s90, %s91
      %p103 = scmp.eq.s32.totalorder %s25, 1
      %p104 = por %p102, %p103
      %p106 = scmp.ne.s32.totalorder %s91, %s105
      %p107 = scmp.eq.s32.totalorder %s25, 0
      %p108 = por %p106, %p107
      %s110 = sadd.s32 %s109, 1
      %p113 = scmp.eq.s32.totalorder %s19, 1
      %p114 = scmp.ne.s32.totalorder %s109, %s111
      %p115 = scmp.eq.s32.totalorder %s19, 0
      %p116 = por %p114, %p115
      %p117 = scmp.ne.s32.totalorder %s109, %s111
      %p118 = scmp.eq.s32.totalorder %s24, 1
      %p119 = por %p117, %p118
      %p120 = scmp.ne.s32.totalorder %s111, %s112
      %p121 = scmp.eq.s32.totalorder %s24, 0
      %p122 = por %p120, %p121
      %p123 = scmp.ne.s32.totalorder %s111, %s112
      %p124 = scmp.eq.s32.totalorder %s25, 1
      %p125 = por %p123, %p124
      %p127 = scmp.ne.s32.totalorder %s112, %s126
      %p128 = scmp.eq.s32.totalorder %s25, 0
      %p129 = por %p127, %p128
      %s130 = ssub.s32 %s26, %s38
      %s131 = ssub.s32 %s27, %s34
      %s132 = sor.u32 %s130, %s131
      %p133 = scmp.eq.s32.totalorder %s132, 0
      %s135 = sadd.s32 %s134, 1
      %s136 = scalar_select %p133, %s134, %s135
      %p139 = pneg %p133
      %p140 = scmp.eq.s32.totalorder %s19, 1
      %p141 = por %p139, %p140
      %p142 = scmp.ne.s32.totalorder %s134, %s137
      %p143 = scmp.eq.s32.totalorder %s19, 0
      %p144 = por %p142, %p143
      %p145 = scmp.ne.s32.totalorder %s134, %s137
      %p146 = scmp.eq.s32.totalorder %s24, 1
      %p147 = por %p145, %p146
      %p148 = scmp.ne.s32.totalorder %s137, %s138
      %p149 = scmp.eq.s32.totalorder %s24, 0
      %p150 = por %p148, %p149
      %p151 = scmp.ne.s32.totalorder %s137, %s138
      %p152 = scmp.eq.s32.totalorder %s25, 1
      %p153 = por %p151, %p152
      %p155 = scmp.ne.s32.totalorder %s138, %s154
      %p156 = scmp.eq.s32.totalorder %s25, 0
      %p157 = por %p155, %p156
      %s158 = ssub.s32 %s26, %s38
      %s159 = ssub.s32 %s27, %s34
      %s160 = sor.u32 %s158, %s159
      %p161 = scmp.eq.s32.totalorder %s160, 0
      %s163 = sadd.s32 %s162, 1
      %s164 = scalar_select %p161, %s162, %s163
      %p167 = pneg %p161
      %p168 = scmp.eq.s32.totalorder %s19, 1
      %p169 = por %p167, %p168
      %p170 = scmp.ne.s32.totalorder %s162, %s165
      %p171 = scmp.eq.s32.totalorder %s19, 0
      %p172 = por %p170, %p171
      %p173 = scmp.ne.s32.totalorder %s162, %s165
      %p174 = scmp.eq.s32.totalorder %s24, 1
      %p175 = por %p173, %p174
      %p176 = scmp.ne.s32.totalorder %s165, %s166
      %p177 = scmp.eq.s32.totalorder %s24, 0
      %p178 = por %p176, %p177
      %p179 = scmp.ne.s32.totalorder %s165, %s166
      %p180 = scmp.eq.s32.totalorder %s25, 1
      %p181 = por %p179, %p180
      %p183 = scmp.ne.s32.totalorder %s166, %s182
      %p184 = scmp.eq.s32.totalorder %s25, 0
      %p185 = por %p183, %p184
      %s186 = ssub.s32 %s26, %s38
      %s187 = ssub.s32 %s27, %s34
      %s188 = sor.u32 %s186, %s187
      %p189 = scmp.eq.s32.totalorder %s188, 0
      %s191 = sadd.s32 %s190, 1
      %s192 = scalar_select %p189, %s190, %s191
      %p195 = pneg %p189
      %p196 = scmp.eq.s32.totalorder %s19, 1
      %p197 = por %p195, %p196
      %p198 = scmp.ne.s32.totalorder %s190, %s193
      %p199 = scmp.eq.s32.totalorder %s19, 0
      %p200 = por %p198, %p199
      %p201 = scmp.ne.s32.totalorder %s190, %s193
      %p202 = scmp.eq.s32.totalorder %s24, 1
      %p203 = por %p201, %p202
      %p204 = scmp.ne.s32.totalorder %s193, %s194
      %p205 = scmp.eq.s32.totalorder %s24, 0
      %p206 = por %p204, %p205
      %p207 = scmp.ne.s32.totalorder %s193, %s194
      %p208 = scmp.eq.s32.totalorder %s25, 1
      %p209 = por %p207, %p208
      %p211 = scmp.ne.s32.totalorder %s194, %s210
      %p212 = scmp.eq.s32.totalorder %s25, 0
      %p213 = por %p211, %p212
      %p214 = scmp.le.s32.totalorder 1, %s19
      %p215 = scmp.lt.s32.totalorder %s19, 3
      %p216 = pnand %p214, %p215
      %p217 = pneg %p216
      // Predicated region
      $region9: #{tpu_custom_call.1} parent=5 // pred_check
        _
      $region10: #{tpu_custom_call.1} parent=5 // pred_check_branch
        %219 = sbr.rel (%p216) target = $region12
      $region11: #{tpu_custom_call.1} parent=5 // pred_region
        %s220 = ssub.s32 %s19, 1
        // Predicated region
        $region13: #{tpu_custom_call.1} parent=11 // pred_check
          %p221 = pneg %p80
        $region14: #{tpu_custom_call.1} parent=11 // pred_check_branch
          %223 = sbr.rel (%p221) target = $region16
        $region15: #{tpu_custom_call.1} parent=11 // pred_region
          _
        $region16: #{tpu_custom_call.1} parent=11 // pred_fallthru
          _
        // Predicated region
        $region17: #{tpu_custom_call.1} parent=11 // pred_check
          %p224 = pneg %p101
        $region18: #{tpu_custom_call.1} parent=11 // pred_check_branch
          %226 = sbr.rel (%p224) target = $region20
        $region19: #{tpu_custom_call.1} parent=11 // pred_region
          _
        $region20: #{tpu_custom_call.1} parent=11 // pred_fallthru
          _
        // Predicated region
        $region21: #{tpu_custom_call.1} parent=11 // pred_check
          %p227 = pneg %p122
        $region22: #{tpu_custom_call.1} parent=11 // pred_check_branch
          %229 = sbr.rel (%p227) target = $region24
        $region23: #{tpu_custom_call.1} parent=11 // pred_region
          _
        $region24: #{tpu_custom_call.1} parent=11 // pred_fallthru
          _
      $region12: #{tpu_custom_call.1} parent=5 // pred_fallthru
        _
      %p230 = scmp.lt.s32.totalorder %s19, 2
      // Predicated region
      $region25: #{tpu_custom_call.1} parent=5 // pred_check
        %p231 = pneg %p230
      $region26: #{tpu_custom_call.1} parent=5 // pred_check_branch
        %233 = sbr.rel (%p231) target = $region28
      $region27: #{tpu_custom_call.1} parent=5 // pred_region
        // Predicated region
        $region29: #{tpu_custom_call.1} parent=27 // pred_check
          %p234 = pneg %p53
        $region30: #{tpu_custom_call.1} parent=27 // pred_check_branch
          %236 = sbr.rel (%p234) target = $region32
        $region31: #{tpu_custom_call.1} parent=27 // pred_region
          %p237 = scmp.lt.s32.totalorder %s26, 1
          %s238 = scalar_select %p237, %s26, 1
          %p239 = scmp.lt.s32.totalorder %s27, 0
          %s240 = scalar_select %p239, %s27, 0
          %s241 = smul.addr %s238, 4
          %s242 = sadd.s32 %s240, %s241
          %s243 = smul.addr %s242, 8
          %s244 = scalar_lea.vmem %s0, %s243
        $region32: #{tpu_custom_call.1} parent=27 // pred_fallthru
          _
      $region28: #{tpu_custom_call.1} parent=5 // pred_fallthru
        _
      %p245 = scmp.le.s32.totalorder 1, %s19
      %p246 = scmp.lt.s32.totalorder %s19, 3
      %p247 = pnand %p245, %p246
      %p248 = pneg %p247
      // Predicated region
      $region33: #{tpu_custom_call.1} parent=5 // pred_check
        _
      $region34: #{tpu_custom_call.1} parent=5 // pred_check_branch
        %250 = sbr.rel (%p247) target = $region36
      $region35: #{tpu_custom_call.1} parent=5 // pred_region
        %s251 = ssub.s32 %s19, 1
        %p252 = scmp.lt.s32.totalorder %s28, 1
        %s253 = scalar_select %p252, %s28, 1
        %p254 = scmp.lt.s32.totalorder %s29, 0
        %s255 = scalar_select %p254, %s29, 0
        %s256 = smul.addr %s253, 4
        %s257 = sadd.s32 %s255, %s256
        %s258 = smul.addr %s257, 8
        %s259 = scalar_lea.vmem %s0, %s258
        %p260 = pneg %p59
        %p261 = pneg %p56
        %p262 = pneg %p80
        %p263 = pneg %p77
        %p264 = pneg %p101
        %p265 = pneg %p98
        %p266 = pneg %p122
        %p267 = pneg %p119
        %p268 = pneg %p150
        %p269 = pneg %p147
        %s270 = sand.u32 %s137, 1
        %s271 = scalar_lea.sflag [#allocation3], %s270
        %s272 = sand.u32 %s137, 1
        %s273 = smul.addr %s272, 32
        %s274 = scalar_lea.vmem [#allocation2], %s273
        %p275 = pneg %p178
        %p276 = pneg %p175
        %s277 = sand.u32 %s24, 1
        %s278 = scalar_lea.sflag [#allocation5], %s277
        %s279 = sand.u32 %s165, 1
        %s280 = scalar_lea.vmem [#allocation4], %s279
        %p281 = pneg %p206
        %p282 = pneg %p203
        %s283 = sand.u32 %s24, 1
        %s284 = scalar_lea.sflag [#allocation5], %s283
        %s285 = sand.u32 %s193, 1
        %s286 = scalar_lea.vmem [#allocation6], %s285
        %p287 = scmp.lt.s32.totalorder %s28, 1
        %s288 = scalar_select %p287, %s28, 1
        %p289 = scmp.lt.s32.totalorder %s29, 0
        %s290 = scalar_select %p289, %s29, 0
        %s291 = smul.addr %s288, 4
        %s292 = sadd.s32 %s290, %s291
        %s293 = smul.addr %s292, 8
        %s294 = scalar_lea.vmem %s0, %s293
        %v295 = vld [vmem:[%s294] sm:$0xff]
        %v296 = vld [vmem:[%s294 + $0x8] sm:$0xff]
        %v297 = vld [vmem:[%s294 + $0x10] sm:$0xff]
        %v298 = vld [vmem:[%s294 + $0x18] sm:$0xff]
        %v299 = vld [vmem:[%s1] sm:$0xff]
        %v300 = vld [vmem:[%s1 + $0x8] sm:$0xff]
        %v301 = vld [vmem:[%s1 + $0x10] sm:$0xff]
        %v302 = vld [vmem:[%s1 + $0x18] sm:$0xff]
        %v303 = vld [vmem:[%s1 + $0x20] sm:$0xff]
        %v304 = vld [vmem:[%s1 + $0x28] sm:$0xff]
        %v305 = vld [vmem:[%s1 + $0x30] sm:$0xff]
        %v306 = vld [vmem:[%s1 + $0x38] sm:$0xff]
        %v307 = vld [vmem:[%s1 + $0x40] sm:$0xff]
        %v308 = vld [vmem:[%s1 + $0x48] sm:$0xff]
        %v309 = vld [vmem:[%s1 + $0x50] sm:$0xff]
        %v310 = vld [vmem:[%s1 + $0x58] sm:$0xff]
        %v311 = vld [vmem:[%s1 + $0x60] sm:$0xff]
        %v312 = vld [vmem:[%s1 + $0x68] sm:$0xff]
        %v313 = vld [vmem:[%s1 + $0x70] sm:$0xff]
        %v314 = vld [vmem:[%s1 + $0x78] sm:$0xff]
        %v315 = vld [vmem:[%s2] sm:$0xff]
        %v316 = vld [vmem:[%s2 + $0x8] sm:$0xff]
        %v317 = vld [vmem:[%s2 + $0x10] sm:$0xff]
        %v318 = vld [vmem:[%s2 + $0x18] sm:$0xff]
        %v319 = vld [vmem:[%s3] sm:$0xff]
        %v320 = vld [vmem:[%s3 + $0x8] sm:$0xff]
        %v321 = vld [vmem:[%s3 + $0x10] sm:$0xff]
        %v322 = vld [vmem:[%s3 + $0x18] sm:$0xff]
        %v323 = vld [vmem:[%s3 + $0x20] sm:$0xff]
        %v324 = vld [vmem:[%s3 + $0x28] sm:$0xff]
        %v325 = vld [vmem:[%s3 + $0x30] sm:$0xff]
        %v326 = vld [vmem:[%s3 + $0x38] sm:$0xff]
        %v327 = vld [vmem:[%s3 + $0x40] sm:$0xff]
        %v328 = vld [vmem:[%s3 + $0x48] sm:$0xff]
        %v329 = vld [vmem:[%s3 + $0x50] sm:$0xff]
        %v330 = vld [vmem:[%s3 + $0x58] sm:$0xff]
        %v331 = vld [vmem:[%s3 + $0x60] sm:$0xff]
        %v332 = vld [vmem:[%s3 + $0x68] sm:$0xff]
        %v333 = vld [vmem:[%s3 + $0x70] sm:$0xff]
        %v334 = vld [vmem:[%s3 + $0x78] sm:$0xff]
        %vm335 = vcmask 261120
        %v337 = vsel %vm335, %v299, 0
        %v340 = vsel %vm335, %v300, 0
        %v343 = vsel %vm335, %v301, 0
        %v346 = vsel %vm335, %v302, 0
        %v349 = vsel %vm335, %v303, 0
        %v352 = vsel %vm335, %v304, 0
        %v355 = vsel %vm335, %v305, 0
        %v358 = vsel %vm335, %v306, 0
        %v361 = vsel %vm335, %v307, 0
        %v364 = vsel %vm335, %v308, 0
        %v367 = vsel %vm335, %v309, 0
        %v370 = vsel %vm335, %v310, 0
        %v373 = vsel %vm335, %v311, 0
        %v376 = vsel %vm335, %v312, 0
        %v379 = vsel %vm335, %v313, 0
        %v382 = vsel %vm335, %v314, 0
        %384 = vmatprep.subr.mxu0 0.0
        %385 = vmatpush1.msra.mxu0 %v295
        %386 = vmatprep.subr.mxu0 0.0
        %387 = vmatpush1.msra.mxu0 %v296
        %388 = vmatprep.subr.mxu0 0.0
        %389 = vmatpush1.msra.mxu0 %v297
        %390 = vmatprep.subr.mxu0 0.0
        %391 = vmatpush1.msra.mxu0 %v298
        %392 = vmatprep.subr.mxu0 0.0
        %393 = vmatpush1.msra.mxu0 0.0
        %394 = vmatprep.subr.mxu0 0.0
        %395 = vmatpush1.msra.mxu0 0.0
        %396 = vmatprep.subr.mxu0 0.0
        %397 = vmatpush1.msra.mxu0 0.0
        %398 = vmatprep.subr.mxu0 0.0
        %399 = vmatpush1.msra.mxu0 0.0
        %400 = vmatprep.subr.mxu0 0.0
        %401 = vmatpush1.msra.mxu0 0.0
        %402 = vmatprep.subr.mxu0 0.0
        %403 = vmatpush1.msra.mxu0 0.0
        %404 = vmatprep.subr.mxu0 0.0
        %405 = vmatpush1.msra.mxu0 0.0
        %406 = vmatprep.subr.mxu0 0.0
        %407 = vmatpush1.msra.mxu0 0.0
        %408 = vmatprep.subr.mxu0 0.0
        %409 = vmatpush1.msra.mxu0 0.0
        %410 = vmatprep.subr.mxu0 0.0
        %411 = vmatpush1.msra.mxu0 0.0
        %412 = vmatprep.subr.mxu0 0.0
        %413 = vmatpush1.msra.mxu0 0.0
        %414 = vmatprep.subr.mxu0 0.0
        %415 = vmatpush1.msra.mxu0 0.0
        %416 = vmatprep.subr.mxu0 0.0
        %417 = vmatpush1.msra.mxu0 0.0
        %418 = vmatprep.subr.mxu0 0.0
        %419 = vmatpush1.msra.mxu0 0.0
        %420 = vmatprep.subr.mxu0 0.0
        %421 = vmatpush1.msra.mxu0 0.0
        %422 = vmatprep.subr.mxu0 0.0
        %423 = vmatpush1.msra.mxu0 0.0
        %424 = vmatprep.subr.mxu0 0.0
        %425 = vmatpush1.msra.mxu0 0.0
        %426 = vmatprep.subr.mxu0 0.0
        %427 = vmatpush1.msra.mxu0 0.0
        %428 = vmatprep.subr.mxu0 0.0
        %429 = vmatpush1.msra.mxu0 0.0
        %430 = vmatprep.subr.mxu0 0.0
        %431 = vmatpush1.msra.mxu0 0.0
        %432 = vmatprep.subr.mxu0 0.0
        %433 = vmatpush1.msra.mxu0 0.0
        %434 = vmatprep.subr.mxu0 0.0
        %435 = vmatpush1.msra.mxu0 0.0
        %436 = vmatprep.subr.mxu0 0.0
        %437 = vmatpush1.msra.mxu0 0.0
        %438 = vmatprep.subr.mxu0 0.0
        %439 = vmatpush1.msra.mxu0 0.0
        %440 = vmatprep.subr.mxu0 0.0
        %441 = vmatpush1.msra.mxu0 0.0
        %442 = vmatprep.subr.mxu0 0.0
        %443 = vmatpush1.msra.mxu0 0.0
        %444 = vmatprep.subr.mxu0 0.0
        %445 = vmatpush1.msra.mxu0 0.0
        %446 = vmatprep.subr.mxu0 0.0
        %447 = vmatpush1.msra.mxu0 0.0
        %448 = vmatprep.mubr.f32.mxu0 0.0
        %449 = vmatmul.mubr.f32.gmra.mrb[0].mxu0 %v337
        %v450 = vpop.f32.mrb[0].mxu0
        %v451 = vadd.f32 0.0, %v450
        %v452 = vpop.f32.mrb[0].mxu0
        %453 = vmatprep.mubr.f32.mxu0 0.0
        %454 = vmatmul.mubr.f32.gmra.mrb[0].mxu0 %v340
        %v455 = vpop.f32.mrb[0].mxu0
        %v456 = vadd.f32 0.0, %v455
        %v457 = vpop.f32.mrb[0].mxu0
        %458 = vmatprep.mubr.f32.mxu0 0.0
        %459 = vmatmul.mubr.f32.gmra.mrb[0].mxu0 %v343
        %v460 = vpop.f32.mrb[0].mxu0
        %v461 = vadd.f32 0.0, %v460
        %v462 = vpop.f32.mrb[0].mxu0
        %463 = vmatprep.mubr.f32.mxu0 0.0
        %464 = vmatmul.mubr.f32.gmra.mrb[0].mxu0 %v346
        %v465 = vpop.f32.mrb[0].mxu0
        %v466 = vadd.f32 0.0, %v465
        %v467 = vpop.f32.mrb[0].mxu0
        %468 = vmatprep.mubr.f32.mxu0 0.0
        %469 = vmatmul.mubr.f32.gmra.mrb[0].mxu0 %v349
        %v470 = vpop.f32.mrb[0].mxu0
        %v471 = vadd.f32 0.0, %v470
        %v472 = vpop.f32.mrb[0].mxu0
        %473 = vmatprep.mubr.f32.mxu0 0.0
        %474 = vmatmul.mubr.f32.gmra.mrb[0].mxu0 %v352
        %v475 = vpop.f32.mrb[0].mxu0
        %v476 = vadd.f32 0.0, %v475
        %v477 = vpop.f32.mrb[0].mxu0
        %478 = vmatprep.mubr.f32.mxu0 0.0
        %479 = vmatmul.mubr.f32.gmra.mrb[0].mxu0 %v355
        %v480 = vpop.f32.mrb[0].mxu0
        %v481 = vadd.f32 0.0, %v480
        %v482 = vpop.f32.mrb[0].mxu0
        %483 = vmatprep.mubr.f32.mxu0 0.0
        %484 = vmatmul.mubr.f32.gmra.mrb[0].mxu0 %v358
        %v485 = vpop.f32.mrb[0].mxu0
        %v486 = vadd.f32 0.0, %v485
        %v487 = vpop.f32.mrb[0].mxu0
        %488 = vmatprep.mubr.f32.mxu0 0.0
        %489 = vmatmul.mubr.f32.gmra.mrb[0].mxu0 %v361
        %v490 = vpop.f32.mrb[0].mxu0
        %v491 = vadd.f32 0.0, %v490
        %v492 = vpop.f32.mrb[0].mxu0
        %493 = vmatprep.mubr.f32.mxu0 0.0
        %494 = vmatmul.mubr.f32.gmra.mrb[0].mxu0 %v364
        %v495 = vpop.f32.mrb[0].mxu0
        %v496 = vadd.f32 0.0, %v495
        %v497 = vpop.f32.mrb[0].mxu0
        %498 = vmatprep.mubr.f32.mxu0 0.0
        %499 = vmatmul.mubr.f32.gmra.mrb[0].mxu0 %v367
        %v500 = vpop.f32.mrb[0].mxu0
        %v501 = vadd.f32 0.0, %v500
        %v502 = vpop.f32.mrb[0].mxu0
        %503 = vmatprep.mubr.f32.mxu0 0.0
        %504 = vmatmul.mubr.f32.gmra.mrb[0].mxu0 %v370
        %v505 = vpop.f32.mrb[0].mxu0
        %v506 = vadd.f32 0.0, %v505
        %v507 = vpop.f32.mrb[0].mxu0
        %508 = vmatprep.mubr.f32.mxu0 0.0
        %509 = vmatmul.mubr.f32.gmra.mrb[0].mxu0 %v373
        %v510 = vpop.f32.mrb[0].mxu0
        %v511 = vadd.f32 0.0, %v510
        %v512 = vpop.f32.mrb[0].mxu0
        %513 = vmatprep.mubr.f32.mxu0 0.0
        %514 = vmatmul.mubr.f32.gmra.mrb[0].mxu0 %v376
        %v515 = vpop.f32.mrb[0].mxu0
        %v516 = vadd.f32 0.0, %v515
        %v517 = vpop.f32.mrb[0].mxu0
        %518 = vmatprep.mubr.f32.mxu0 0.0
        %519 = vmatmul.mubr.f32.gmra.mrb[0].mxu0 %v379
        %v520 = vpop.f32.mrb[0].mxu0
        %v521 = vadd.f32 0.0, %v520
        %v522 = vpop.f32.mrb[0].mxu0
        %523 = vmatprep.mubr.f32.mxu0 0.0
        %524 = vmatmul.mubr.f32.gmra.mrb[0].mxu0 %v382
        %v525 = vpop.f32.mrb[0].mxu0
        %v526 = vadd.f32 0.0, %v525
        %v527 = vpop.f32.mrb[0].mxu0
        %528 = vdwg.mxu0
        %v529 = vmul.f32 %v451, 2.0
        %v530 = vmul.f32 %v456, 2.0
        %v531 = vmul.f32 %v461, 2.0
        %v532 = vmul.f32 %v466, 2.0
        %v533 = vmul.f32 %v471, 2.0
        %v534 = vmul.f32 %v476, 2.0
        %v535 = vmul.f32 %v481, 2.0
        %v536 = vmul.f32 %v486, 2.0
        %v537 = vmul.f32 %v491, 2.0
        %v538 = vmul.f32 %v496, 2.0
        %v539 = vmul.f32 %v501, 2.0
        %v540 = vmul.f32 %v506, 2.0
        %v541 = vmul.f32 %v511, 2.0
        %v542 = vmul.f32 %v516, 2.0
        %v543 = vmul.f32 %v521, 2.0
        %v544 = vmul.f32 %v526, 2.0
        %546 = vset.pattern.permute.xlu0 0
        %547 = vperm.xlu0 %546, %v319
        %v548 = vpop.permute.xlu0 %547
        %551 = vset.pattern.permute.xlu0 0
        %552 = vperm.xlu0 %551, %v320
        %v553 = vpop.permute.xlu0 %552
        %556 = vset.pattern.permute.xlu0 0
        %557 = vperm.xlu0 %556, %v321
        %v558 = vpop.permute.xlu0 %557
        %561 = vset.pattern.permute.xlu0 0
        %562 = vperm.xlu0 %561, %v322
        %v563 = vpop.permute.xlu0 %562
        %566 = vset.pattern.permute.xlu0 0
        %567 = vperm.xlu0 %566, %v323
        %v568 = vpop.permute.xlu0 %567
        %571 = vset.pattern.permute.xlu0 0
        %572 = vperm.xlu0 %571, %v324
        %v573 = vpop.permute.xlu0 %572
        %576 = vset.pattern.permute.xlu0 0
        %577 = vperm.xlu0 %576, %v325
        %v578 = vpop.permute.xlu0 %577
        %581 = vset.pattern.permute.xlu0 0
        %582 = vperm.xlu0 %581, %v326
        %v583 = vpop.permute.xlu0 %582
        %586 = vset.pattern.permute.xlu0 0
        %587 = vperm.xlu0 %586, %v327
        %v588 = vpop.permute.xlu0 %587
        %591 = vset.pattern.permute.xlu0 0
        %592 = vperm.xlu0 %591, %v328
        %v593 = vpop.permute.xlu0 %592
        %596 = vset.pattern.permute.xlu0 0
        %597 = vperm.xlu0 %596, %v329
        %v598 = vpop.permute.xlu0 %597
        %601 = vset.pattern.permute.xlu0 0
        %602 = vperm.xlu0 %601, %v330
        %v603 = vpop.permute.xlu0 %602
        %606 = vset.pattern.permute.xlu0 0
        %607 = vperm.xlu0 %606, %v331
        %v608 = vpop.permute.xlu0 %607
        %611 = vset.pattern.permute.xlu0 0
        %612 = vperm.xlu0 %611, %v332
        %v613 = vpop.permute.xlu0 %612
        %616 = vset.pattern.permute.xlu0 0
        %617 = vperm.xlu0 %616, %v333
        %v618 = vpop.permute.xlu0 %617
        %621 = vset.pattern.permute.xlu0 0
        %622 = vperm.xlu0 %621, %v334
        %v623 = vpop.permute.xlu0 %622
        %v625 = vsub.f32 %v548, %v529
        %v626 = vsub.f32 %v553, %v530
        %v627 = vsub.f32 %v558, %v531
        %v628 = vsub.f32 %v563, %v532
        %v629 = vsub.f32 %v568, %v533
        %v630 = vsub.f32 %v573, %v534
        %v631 = vsub.f32 %v578, %v535
        %v632 = vsub.f32 %v583, %v536
        %v633 = vsub.f32 %v588, %v537
        %v634 = vsub.f32 %v593, %v538
        %v635 = vsub.f32 %v598, %v539
        %v636 = vsub.f32 %v603, %v540
        %v637 = vsub.f32 %v608, %v541
        %v638 = vsub.f32 %v613, %v542
        %v639 = vsub.f32 %v618, %v543
        %v640 = vsub.f32 %v623, %v544
        %v641 = vlaneseq
        %v642 = vshrl.u32 %v641, 7
        %v643 = vadd.s32 %v642, 8
        %v644 = vadd.s32 %v642, 16
        %v645 = vadd.s32 %v642, 24
        %v646 = vadd.s32 %v642, 32
        %v647 = vadd.s32 %v642, 40
        %v648 = vadd.s32 %v642, 48
        %v649 = vadd.s32 %v642, 56
        %v650 = vadd.s32 %v642, 64
        %v651 = vadd.s32 %v642, 72
        %v652 = vadd.s32 %v642, 80
        %v653 = vadd.s32 %v642, 88
        %v654 = vadd.s32 %v642, 96
        %v655 = vadd.s32 %v642, 104
        %v656 = vadd.s32 %v642, 112
        %v657 = vadd.s32 %v642, 120
        %v658 = vmin.f32 %v625, %v629
        %v659 = vmin.f32 %v626, %v630
        %v660 = vmin.f32 %v627, %v631
        %v661 = vmin.f32 %v628, %v632
        %v662 = vmin.f32 %v658, %v633
        %v663 = vmin.f32 %v659, %v634
        %v664 = vmin.f32 %v660, %v635
        %v665 = vmin.f32 %v661, %v636
        %v666 = vmin.f32 %v662, %v637
        %v667 = vmin.f32 %v663, %v638
        %v668 = vmin.f32 %v664, %v639
        %v669 = vmin.f32 %v665, %v640
        %v670 = vmin.f32 %v666, %v667
        %v671 = vmin.f32 %v668, %v669
        %v672 = vmin.f32 %v670, %v671
        %v673 = vrot.slane %v672, 4
        %v674 = vmin.f32 %v672, %v673
        %v675 = vrot.slane %v674, 2
        %v676 = vmin.f32 %v674, %v675
        %v677 = vrot.slane %v676, 1
        %v678 = vmin.f32 %v676, %v677
        %vm679 = vcmp.eq.f32.partialorder %v625, %v678
        %vm680 = vcmp.eq.f32.partialorder %v626, %v678
        %vm681 = vcmp.eq.f32.partialorder %v627, %v678
        %vm682 = vcmp.eq.f32.partialorder %v628, %v678
        %vm683 = vcmp.eq.f32.partialorder %v629, %v678
        %vm684 = vcmp.eq.f32.partialorder %v630, %v678
        %vm685 = vcmp.eq.f32.partialorder %v631, %v678
        %vm686 = vcmp.eq.f32.partialorder %v632, %v678
        %vm687 = vcmp.eq.f32.partialorder %v633, %v678
        %vm688 = vcmp.eq.f32.partialorder %v634, %v678
        %vm689 = vcmp.eq.f32.partialorder %v635, %v678
        %vm690 = vcmp.eq.f32.partialorder %v636, %v678
        %vm691 = vcmp.eq.f32.partialorder %v637, %v678
        %vm692 = vcmp.eq.f32.partialorder %v638, %v678
        %vm693 = vcmp.eq.f32.partialorder %v639, %v678
        %vm694 = vcmp.eq.f32.partialorder %v640, %v678
        %v695 = vsel %vm679, %v642, 128
        %v696 = vsel %vm680, %v643, 128
        %v697 = vsel %vm681, %v644, 128
        %v698 = vsel %vm682, %v645, 128
        %v699 = vsel %vm683, %v646, 128
        %v700 = vsel %vm684, %v647, 128
        %v701 = vsel %vm685, %v648, 128
        %v702 = vsel %vm686, %v649, 128
        %v703 = vsel %vm687, %v650, 128
        %v704 = vsel %vm688, %v651, 128
        %v705 = vsel %vm689, %v652, 128
        %v706 = vsel %vm690, %v653, 128
        %v707 = vsel %vm691, %v654, 128
        %v708 = vsel %vm692, %v655, 128
        %v709 = vsel %vm693, %v656, 128
        %v710 = vsel %vm694, %v657, 128
        %vm711 = vcmp.lt.s32.totalorder %v695, %v699
        %v712 = vsel %vm711, %v695, %v699
        %vm713 = vcmp.lt.s32.totalorder %v696, %v700
        %v714 = vsel %vm713, %v696, %v700
        %vm715 = vcmp.lt.s32.totalorder %v697, %v701
        %v716 = vsel %vm715, %v697, %v701
        %vm717 = vcmp.lt.s32.totalorder %v698, %v702
        %v718 = vsel %vm717, %v698, %v702
        %vm719 = vcmp.lt.s32.totalorder %v712, %v703
        %v720 = vsel %vm719, %v712, %v703
        %vm721 = vcmp.lt.s32.totalorder %v714, %v704
        %v722 = vsel %vm721, %v714, %v704
        %vm723 = vcmp.lt.s32.totalorder %v716, %v705
        %v724 = vsel %vm723, %v716, %v705
        %vm725 = vcmp.lt.s32.totalorder %v718, %v706
        %v726 = vsel %vm725, %v718, %v706
        %vm727 = vcmp.lt.s32.totalorder %v720, %v707
        %v728 = vsel %vm727, %v720, %v707
        %vm729 = vcmp.lt.s32.totalorder %v722, %v708
        %v730 = vsel %vm729, %v722, %v708
        %vm731 = vcmp.lt.s32.totalorder %v724, %v709
        %v732 = vsel %vm731, %v724, %v709
        %vm733 = vcmp.lt.s32.totalorder %v726, %v710
        %v734 = vsel %vm733, %v726, %v710
        %vm735 = vcmp.lt.s32.totalorder %v728, %v730
        %v736 = vsel %vm735, %v728, %v730
        %vm737 = vcmp.lt.s32.totalorder %v732, %v734
        %v738 = vsel %vm737, %v732, %v734
        %vm739 = vcmp.lt.s32.totalorder %v736, %v738
        %v740 = vsel %vm739, %v736, %v738
        %v741 = vrot.slane %v740, 4
        %vm742 = vcmp.lt.s32.totalorder %v740, %v741
        %v743 = vsel %vm742, %v740, %v741
        %v744 = vrot.slane %v743, 2
        %vm745 = vcmp.lt.s32.totalorder %v743, %v744
        %v746 = vsel %vm745, %v743, %v744
        %v747 = vrot.slane %v746, 1
        %vm748 = vcmp.lt.s32.totalorder %v746, %v747
        %v749 = vsel %vm748, %v746, %v747
        %vm750 = vcmp.eq.s32.totalorder %v642, %v749
        %vm751 = vcmp.eq.s32.totalorder %v643, %v749
        %vm752 = vcmp.eq.s32.totalorder %v644, %v749
        %vm753 = vcmp.eq.s32.totalorder %v645, %v749
        %vm754 = vcmp.eq.s32.totalorder %v646, %v749
        %vm755 = vcmp.eq.s32.totalorder %v647, %v749
        %vm756 = vcmp.eq.s32.totalorder %v648, %v749
        %vm757 = vcmp.eq.s32.totalorder %v649, %v749
        %vm758 = vcmp.eq.s32.totalorder %v650, %v749
        %vm759 = vcmp.eq.s32.totalorder %v651, %v749
        %vm760 = vcmp.eq.s32.totalorder %v652, %v749
        %vm761 = vcmp.eq.s32.totalorder %v653, %v749
        %vm762 = vcmp.eq.s32.totalorder %v654, %v749
        %vm763 = vcmp.eq.s32.totalorder %v655, %v749
        %vm764 = vcmp.eq.s32.totalorder %v656, %v749
        %vm765 = vcmp.eq.s32.totalorder %v657, %v749
        %v766 = vsel %vm750, 1, 0
        %v767 = vsel %vm751, 1, 0
        %v768 = vsel %vm752, 1, 0
        %v769 = vsel %vm753, 1, 0
        %v770 = vsel %vm754, 1, 0
        %v771 = vsel %vm755, 1, 0
        %v772 = vsel %vm756, 1, 0
        %v773 = vsel %vm757, 1, 0
        %v774 = vsel %vm758, 1, 0
        %v775 = vsel %vm759, 1, 0
        %v776 = vsel %vm760, 1, 0
        %v777 = vsel %vm761, 1, 0
        %v778 = vsel %vm762, 1, 0
        %v779 = vsel %vm763, 1, 0
        %v780 = vsel %vm764, 1, 0
        %v781 = vsel %vm765, 1, 0
        %v782 = vcvt.s32.f32 %v766
        %v783 = vcvt.s32.f32 %v767
        %v784 = vcvt.s32.f32 %v768
        %v785 = vcvt.s32.f32 %v769
        %v786 = vcvt.s32.f32 %v770
        %v787 = vcvt.s32.f32 %v771
        %v788 = vcvt.s32.f32 %v772
        %v789 = vcvt.s32.f32 %v773
        %v790 = vcvt.s32.f32 %v774
        %v791 = vcvt.s32.f32 %v775
        %v792 = vcvt.s32.f32 %v776
        %v793 = vcvt.s32.f32 %v777
        %v794 = vcvt.s32.f32 %v778
        %v795 = vcvt.s32.f32 %v779
        %v796 = vcvt.s32.f32 %v780
        %v797 = vcvt.s32.f32 %v781
        %798 = vmatprep.subr.mxu0 0.0
        %799 = vmatpush1.msra.mxu0 %v782
        %800 = vmatprep.subr.mxu0 0.0
        %801 = vmatpush1.msra.mxu0 %v783
        %802 = vmatprep.subr.mxu0 0.0
        %803 = vmatpush1.msra.mxu0 %v784
        %804 = vmatprep.subr.mxu0 0.0
        %805 = vmatpush1.msra.mxu0 %v785
        %806 = vmatprep.subr.mxu0 0.0
        %807 = vmatpush1.msra.mxu0 %v786
        %808 = vmatprep.subr.mxu0 0.0
        %809 = vmatpush1.msra.mxu0 %v787
        %810 = vmatprep.subr.mxu0 0.0
        %811 = vmatpush1.msra.mxu0 %v788
        %812 = vmatprep.subr.mxu0 0.0
        %813 = vmatpush1.msra.mxu0 %v789
        %814 = vmatprep.subr.mxu0 0.0
        %815 = vmatpush1.msra.mxu0 %v790
        %816 = vmatprep.subr.mxu0 0.0
        %817 = vmatpush1.msra.mxu0 %v791
        %818 = vmatprep.subr.mxu0 0.0
        %819 = vmatpush1.msra.mxu0 %v792
        %820 = vmatprep.subr.mxu0 0.0
        %821 = vmatpush1.msra.mxu0 %v793
        %822 = vmatprep.subr.mxu0 0.0
        %823 = vmatpush1.msra.mxu0 %v794
        %824 = vmatprep.subr.mxu0 0.0
        %825 = vmatpush1.msra.mxu0 %v795
        %826 = vmatprep.subr.mxu0 0.0
        %827 = vmatpush1.msra.mxu0 %v796
        %828 = vmatprep.subr.mxu0 0.0
        %829 = vmatpush1.msra.mxu0 %v797
        %830 = vmatprep.subr.mxu0 0.0
        %831 = vmatpush1.msra.mxu0 0.0
        %832 = vmatprep.subr.mxu0 0.0
        %833 = vmatpush1.msra.mxu0 0.0
        %834 = vmatprep.subr.mxu0 0.0
        %835 = vmatpush1.msra.mxu0 0.0
        %836 = vmatprep.subr.mxu0 0.0
        %837 = vmatpush1.msra.mxu0 0.0
        %838 = vmatprep.subr.mxu0 0.0
        %839 = vmatpush1.msra.mxu0 0.0
        %840 = vmatprep.subr.mxu0 0.0
        %841 = vmatpush1.msra.mxu0 0.0
        %842 = vmatprep.subr.mxu0 0.0
        %843 = vmatpush1.msra.mxu0 0.0
        %844 = vmatprep.subr.mxu0 0.0
        %845 = vmatpush1.msra.mxu0 0.0
        %846 = vmatprep.subr.mxu0 0.0
        %847 = vmatpush1.msra.mxu0 0.0
        %848 = vmatprep.subr.mxu0 0.0
        %849 = vmatpush1.msra.mxu0 0.0
        %850 = vmatprep.subr.mxu0 0.0
        %851 = vmatpush1.msra.mxu0 0.0
        %852 = vmatprep.subr.mxu0 0.0
        %853 = vmatpush1.msra.mxu0 0.0
        %854 = vmatprep.subr.mxu0 0.0
        %855 = vmatpush1.msra.mxu0 0.0
        %856 = vmatprep.subr.mxu0 0.0
        %857 = vmatpush1.msra.mxu0 0.0
        %858 = vmatprep.subr.mxu0 0.0
        %859 = vmatpush1.msra.mxu0 0.0
        %860 = vmatprep.subr.mxu0 0.0
        %861 = vmatpush1.msra.mxu0 0.0
        %862 = vmatprep.mubr.f32.mxu0 0.0
        %863 = vmatmul.mubr.f32.gmra.mrb[0].mxu0 %v315
        %v864 = vpop.f32.mrb[0].mxu0
        %v865 = vadd.f32 0.0, %v864
        %v866 = vpop.f32.mrb[0].mxu0
        %867 = vmatprep.mubr.f32.mxu0 0.0
        %868 = vmatmul.mubr.f32.gmra.mrb[0].mxu0 %v316
        %v869 = vpop.f32.mrb[0].mxu0
        %v870 = vadd.f32 0.0, %v869
        %v871 = vpop.f32.mrb[0].mxu0
        %872 = vmatprep.mubr.f32.mxu0 0.0
        %873 = vmatmul.mubr.f32.gmra.mrb[0].mxu0 %v317
        %v874 = vpop.f32.mrb[0].mxu0
        %v875 = vadd.f32 0.0, %v874
        %v876 = vpop.f32.mrb[0].mxu0
        %877 = vmatprep.mubr.f32.mxu0 0.0
        %878 = vmatmul.mubr.f32.gmra.mrb[0].mxu0 %v318
        %v879 = vpop.f32.mrb[0].mxu0
        %v880 = vadd.f32 0.0, %v879
        %v881 = vpop.f32.mrb[0].mxu0
        %882 = vdwg.mxu0
        %883 = vst [vmem:[%s274] sm:$0xff] %v865
        %884 = vst [vmem:[%s274 + $0x8] sm:$0xff] %v870
        %885 = vst [vmem:[%s274 + $0x10] sm:$0xff] %v875
        %886 = vst [vmem:[%s274 + $0x18] sm:$0xff] %v880
        %887 = vst [vmem:[%s280] sm:$0x1] %v749
        %v888 = vsub.f32 %v295, %v865
        %v889 = vsub.f32 %v296, %v870
        %v890 = vsub.f32 %v297, %v875
        %v891 = vsub.f32 %v298, %v880
        %v892 = vmul.f32 %v888, %v888
        %v893 = vmul.f32 %v889, %v889
        %v894 = vmul.f32 %v890, %v890
        %v895 = vmul.f32 %v891, %v891
        %v896 = vadd.f32 %v892, %v893
        %v897 = vadd.f32 %v896, %v894
        %v898 = vadd.f32 %v897, %v895
        %v899 = vrot.slane %v898, 4
        %v900 = vadd.f32 %v898, %v899
        %v901 = vrot.slane %v900, 2
        %v902 = vadd.f32 %v900, %v901
        %v903 = vrot.slane %v902, 1
        %v904 = vadd.f32 %v902, %v903
        %905 = vst [vmem:[%s286] sm:$0x1] %v904
        %s906 = sand.u32 %s137, 1
        %s907 = scalar_lea.sflag [#allocation3], %s906
        %s908 = sand.u32 %s137, 1
        %s909 = smul.addr %s908, 32
        %s910 = scalar_lea.vmem [#allocation2], %s909
        %s911 = sand.u32 %s24, 1
        %s912 = scalar_lea.sflag [#allocation5], %s911
        %s913 = sand.u32 %s165, 1
        %s914 = scalar_lea.vmem [#allocation4], %s913
        %s915 = sand.u32 %s24, 1
        %s916 = scalar_lea.sflag [#allocation5], %s915
        %s917 = sand.u32 %s193, 1
        %s918 = scalar_lea.vmem [#allocation6], %s917
        // Predicated region
        $region37: #{tpu_custom_call.1} parent=35 // pred_check
          %p919 = pneg %p147
        $region38: #{tpu_custom_call.1} parent=35 // pred_check_branch
          %921 = sbr.rel (%p919) target = $region40
        $region39: #{tpu_custom_call.1} parent=35 // pred_region
          %s923 = ssub.s32 512, 512
          %924 = vsyncadd %s907, %s923
          %s925 = smul.addr %s28, 4
          %s926 = sadd.s32 %s29, %s925
          %s927 = smul.addr %s926, 128
          %s928 = scalar_lea.hbm %s4, %s927
          %s929 = sshll.u32 %s910, 4
          %s930 = int_to_ptr.vmem [resolvable:$true] %s929
          %935 = dma.vmem_to_hbm [thread:$0]  %s930, 512, %s928, %s907, 128, 128, 8
        $region40: #{tpu_custom_call.1} parent=35 // pred_fallthru
          _
        // Predicated region
        $region41: #{tpu_custom_call.1} parent=35 // pred_check
          %p936 = pneg %p175
        $region42: #{tpu_custom_call.1} parent=35 // pred_check_branch
          %938 = sbr.rel (%p936) target = $region44
        $region43: #{tpu_custom_call.1} parent=35 // pred_region
          %s940 = ssub.s32 16, 16
          %941 = vsyncadd %s912, %s940
          %s942 = sadd.s32 %s29, %s28
          %s943 = smul.addr %s942, 16
          %s944 = scalar_lea.hbm %s5, %s943
          %s946 = sshll.u32 %s914, 4
          %s947 = int_to_ptr.vmem [resolvable:$true] %s946
          %949 = dma.vmem_to_hbm [thread:$0]  %s947, 16, %s944, %s912
        $region44: #{tpu_custom_call.1} parent=35 // pred_fallthru
          _
        // Predicated region
        $region45: #{tpu_custom_call.1} parent=35 // pred_check
          %p950 = pneg %p203
        $region46: #{tpu_custom_call.1} parent=35 // pred_check_branch
          %952 = sbr.rel (%p950) target = $region48
        $region47: #{tpu_custom_call.1} parent=35 // pred_region
          %s954 = ssub.s32 16, 16
          %955 = vsyncadd %s916, %s954
          %s956 = sadd.s32 %s29, %s28
          %s957 = smul.addr %s956, 16
          %s958 = scalar_lea.hbm %s6, %s957
          %s960 = sshll.u32 %s918, 4
          %s961 = int_to_ptr.vmem [resolvable:$true] %s960
          %963 = dma.vmem_to_hbm [thread:$0]  %s961, 16, %s958, %s916
        $region48: #{tpu_custom_call.1} parent=35 // pred_fallthru
          _
      $region36: #{tpu_custom_call.1} parent=5 // pred_fallthru
        _
      %p964 = scmp.le.s32.totalorder 2, %s19
      // Predicated region
      $region49: #{tpu_custom_call.1} parent=5 // pred_check
        %p965 = pneg %p964
      $region50: #{tpu_custom_call.1} parent=5 // pred_check_branch
        %967 = sbr.rel (%p965) target = $region52
      $region51: #{tpu_custom_call.1} parent=5 // pred_region
        %s968 = ssub.s32 %s19, 2
        // Predicated region
        $region53: #{tpu_custom_call.1} parent=51 // pred_check
          %p969 = pneg %p153
        $region54: #{tpu_custom_call.1} parent=51 // pred_check_branch
          %971 = sbr.rel (%p969) target = $region56
        $region55: #{tpu_custom_call.1} parent=51 // pred_region
          %s972 = sand.u32 %s138, 1
          %s973 = scalar_lea.sflag [#allocation3], %s972
          %s974 = sand.u32 %s138, 1
          %s975 = smul.addr %s974, 32
          %s976 = scalar_lea.vmem [#allocation2], %s975
          %977 = dma.done %s973, 512
        $region56: #{tpu_custom_call.1} parent=51 // pred_fallthru
          _
        // Predicated region
        $region57: #{tpu_custom_call.1} parent=51 // pred_check
          %p978 = pneg %p181
        $region58: #{tpu_custom_call.1} parent=51 // pred_check_branch
          %980 = sbr.rel (%p978) target = $region60
        $region59: #{tpu_custom_call.1} parent=51 // pred_region
          %s981 = sand.u32 %s25, 1
          %s982 = scalar_lea.sflag [#allocation5], %s981
          %s983 = sand.u32 %s166, 1
          %s984 = scalar_lea.vmem [#allocation4], %s983
          %985 = dma.done %s982, 16
        $region60: #{tpu_custom_call.1} parent=51 // pred_fallthru
          _
        // Predicated region
        $region61: #{tpu_custom_call.1} parent=51 // pred_check
          %p986 = pneg %p209
        $region62: #{tpu_custom_call.1} parent=51 // pred_check_branch
          %988 = sbr.rel (%p986) target = $region64
        $region63: #{tpu_custom_call.1} parent=51 // pred_region
          %s989 = sand.u32 %s25, 1
          %s990 = scalar_lea.sflag [#allocation5], %s989
          %s991 = sand.u32 %s194, 1
          %s992 = scalar_lea.vmem [#allocation6], %s991
          %993 = dma.done %s990, 16
        $region64: #{tpu_custom_call.1} parent=51 // pred_fallthru
          _
      $region52: #{tpu_custom_call.1} parent=5 // pred_fallthru
        _
    $region6: #{tpu_custom_call.1} parent=1 // loop_footer
      %s23 = sadd.s32 1, %s19
    $region7: #{tpu_custom_call.1} parent=1 // loop_footer_branch
      %18 = sbr.rel target = $region3
    $region8: #{tpu_custom_call.1} parent=1 // loop_exit
      _
    %994 = vsyncpa [#allocation3], 1
    %s995 = scalar_lea.sflag [#allocation3], 1
    %996 = vsyncpa %s995, 1
    %997 = vsyncpa [#allocation5], 1
    %s998 = scalar_lea.sflag [#allocation5], 1
    %999 = vsyncpa %s998, 1

</llo_original>
